<compile_context>
chip_gen: v5e
topology: v5e:2x2
jax: 0.10.0
libtpu: 0.0.40
codegen_flags: <defaults>
</compile_context>

<pallas_src>
import jax
import jax.numpy as jnp
import numpy as np
from jax import lax
from jax.experimental import pallas as pl
from jax.experimental.pallas import tpu as pltpu


def _round_up(x, m):
    return ((x + m - 1) // m) * m


# ------------------------------------------------------------------
# Fused kernel: 1x1 conv + BN + PReLU  ->  KxK depthwise + BN + PReLU
#               ->  row-strided 1x1 project + BN (+ residual)
# Layout inside the kernel: (channels, flattened spatial) with spatial on the
# 128-lane axis (lane-dense).
# ------------------------------------------------------------------
def _make_fused_kernel(*, KH, KW, H, W, Wp, ph, pw, sh, Ho,
                       HpWp_ext, L1, L_out, L_out_pad, residual, mm_dtype):
    KT = KH * KW

    def kernel(x_ref, w1_ref, wd_ref, cg_ref, w3_ref, b3_ref, o_ref, ypad, ysel):
        G = ypad.shape[0]

        cg = cg_ref[...]                       # (G, 4): [bn1_bias | prelu1 | bn2_bias | prelu2]
        b1 = cg[:, 0:1]
        a1 = cg[:, 1:2]
        b2 = cg[:, 2:3]
        a2 = cg[:, 3:4]

        # ---- stage 1: 1x1 conv (BN1 scale folded into w1) + bias + PReLU ----
        # (G, Cin) @ (Cin, H*W) -> (G, H*W) on the *unpadded* image (no wrapper
        # pad pass, no pad mask).
        y = jnp.dot(w1_ref[...], x_ref[...], preferred_element_type=jnp.float32)
        y = y + b1
        y = jnp.where(y >= 0.0, y, a1 * y)

        # Scatter the stage-1 result into the zero-bordered padded scratch.
        # Only the border / inter-row-gap / tail lanes are zeroed (the H*W
        # content lanes are fully overwritten right after) -- no full-scratch
        # zero-fill. Zeroing is done every grid step (scratch is per-core, so
        # a program_id(0)==0 gate would be wrong under megacore sharding).
        if ph * Wp + pw > 0:
            ypad[:, 0:ph * Wp + pw] = jnp.zeros((G, ph * Wp + pw), jnp.float32)
        if pw > 0:
            zgap = jnp.zeros((G, 2 * pw), jnp.float32)          # hoisted out of the loop
            for r in range(H - 1):
                gstart = (r + ph) * Wp + pw + W
                ypad[:, gstart:gstart + 2 * pw] = zgap
        tstart = (H - 1 + ph) * Wp + pw + W
        ypad[:, tstart:HpWp_ext] = jnp.zeros((G, HpWp_ext - tstart), jnp.float32)
        for r in range(H):
            base = (r + ph) * Wp + pw
            ypad[:, base:base + W] = y[:, r * W:(r + 1) * W]

        # ---- stage 2: KxK depthwise conv (BN2 scale folded) + bias + PReLU ----
        # Evaluated at stride-1 row resolution over the flattened padded width:
        # tap (kh, kw) is a flat lane shift of kh*Wp + kw.  Wrap-around columns
        # (row ends) are garbage and get discarded.  Sequential accumulation
        # keeps at most two (G, L1) values live.
        wd = wd_ref[...]                       # (G, KT), hoisted out of the tap loop
        acc = None
        for kh in range(KH):
            for kw in range(KW):
                t = kh * KW + kw
                off = kh * Wp + kw
                term = ypad[:, off:off + L1] * wd[:, t:t + 1]
                acc = term if acc is None else acc + term
        y2 = acc + b2
        y2 = jnp.where(y2 >= 0.0, y2, a2 * y2)

        # ---- gather only the sh-strided output rows for the projection ----
        # (halves stage-3 MXU work and output HBM bytes for stride 2; tail is
        # zero-padded so the output store is lane-dense / unmasked).
        if sh == 1:
            ysel[:, 0:L_out] = y2.astype(mm_dtype)
        else:
            for ro in range(Ho):
                src = ro * sh * Wp
                ysel[:, ro * Wp:(ro + 1) * Wp] = y2[:, src:src + Wp].astype(mm_dtype)
        if L_out_pad > L_out:
            ysel[:, L_out:L_out_pad] = jnp.zeros((G, L_out_pad - L_out), mm_dtype)

        # ---- stage 3: 1x1 projection (BN3 scale folded) + bias ----
        z = jnp.dot(w3_ref[...], ysel[...], preferred_element_type=jnp.float32)
        z = z + b3_ref[...]
        o_ref[...] = z                          # lane-dense (Cout, L_out_pad) store

        # ---- residual: add the already-resident input block row-by-row ----
        # (no separate shortcut input / DMA stream; stride==1 and Cin==Cout are
        # asserted in the wrapper, so Ho == H here).
        if residual:
            for r in range(Ho):
                dst = r * Wp
                o_ref[:, dst:dst + W] = (o_ref[:, dst:dst + W]
                                         + x_ref[:, r * W:(r + 1) * W].astype(jnp.float32))

    return kernel


# ------------------------------------------------------------------
# Depth_Wise forward (wrapper, NCHW in / NCHW out)
# ------------------------------------------------------------------
def depth_wise_forward(x_nchw, params, *, stride=(2, 2), padding=(1, 1),
                       residual=False, mm_dtype=jnp.float32):
    N, Cin, H, W = x_nchw.shape
    KH, KW, G = params["wdw"].shape
    Cout = params["w3"].shape[1]
    sh, sw = stride
    ph, pw = padding
    mm_dtype = np.dtype(mm_dtype)

    Hp, Wp = H + 2 * ph, W + 2 * pw
    Hf, Wf = Hp - KH + 1, Wp - KW + 1              # stride-1 depthwise extent
    Ho, Wo = (Hp - KH) // sh + 1, (Wp - KW) // sw + 1
    HW = H * W
    HpWp = Hp * Wp
    HpWp_ext = HpWp + Wp                           # zero tail so every tap slice is in-bounds
    L1 = Hf * Wp                                   # stride-1 rows (flattened, Wp per row)
    L_out = Ho * Wp                                # row-strided projection extent
    L_out_pad = _round_up(L_out, 128)              # lane-dense output stores

    if residual:
        assert stride == (1, 1) and Cin == Cout and Hf == H and Wf == W, \
            "residual Depth_Wise requires stride=(1,1) and in_c == out_c"

    x32 = x_nchw.astype(jnp.float32)
    xr = x32.reshape(N, Cin, HW).astype(mm_dtype)  # channels-first, spatial on lanes

    # Fold BN scales into the conv weights (inference mode); keep bias/alpha.
    w1f = (params["w1"] * params["bn1_scale"][None, :]).T.astype(mm_dtype)              # (G, Cin)
    wdf = (params["wdw"].reshape(KH * KW, G)
           * params["bn2_scale"][None, :]).T.astype(jnp.float32)                        # (G, KT)
    w3f = (params["w3"] * params["bn3_scale"][None, :]).T.astype(mm_dtype)              # (Cout, G)
    cg = jnp.stack([params["bn1_bias"], params["prelu1"],
                    params["bn2_bias"], params["prelu2"]], axis=1).astype(jnp.float32)  # (G, 4)
    b3 = params["bn3_bias"].reshape(Cout, 1).astype(jnp.float32)

    in_specs = [
        pl.BlockSpec((None, Cin, HW), lambda n: (n, 0, 0)),     # x (per image, unpadded)
        pl.BlockSpec((G, Cin), lambda n: (0, 0)),               # w1 (BN1 folded)
        pl.BlockSpec((G, KH * KW), lambda n: (0, 0)),           # depthwise weights (BN2 folded)
        pl.BlockSpec((G, 4), lambda n: (0, 0)),                 # packed bias/alpha vectors
        pl.BlockSpec((Cout, G), lambda n: (0, 0)),              # w3 (BN3 folded)
        pl.BlockSpec((Cout, 1), lambda n: (0, 0)),              # bn3 bias
    ]
    args = [xr, w1f, wdf, cg, w3f, b3]

    # Size-aware VMEM limit (capped at 40 MiB -- v7x only has 64 MiB physical).
    isz = mm_dtype.itemsize
    est = (2 * Cin * HW * isz                      # x, double buffered
           + 2 * Cout * L_out_pad * 4              # output, double buffered
           + 2 * (G * Cin + Cout * G) * isz
           + 2 * (G * KH * KW + G * 4 + Cout) * 4
           + G * HpWp_ext * 4                      # ypad scratch
           + G * L_out_pad * isz                   # ysel scratch
           + (2 << 20))                            # slack
    vmem_limit = int(min(40 << 20, max(16 << 20, 2 * est)))

    kernel = _make_fused_kernel(KH=KH, KW=KW, H=H, W=W, Wp=Wp, ph=ph, pw=pw,
                                sh=sh, Ho=Ho, HpWp_ext=HpWp_ext, L1=L1,
                                L_out=L_out, L_out_pad=L_out_pad,
                                residual=residual, mm_dtype=mm_dtype)

    out_full = pl.pallas_call(
        kernel,
        out_shape=jax.ShapeDtypeStruct((N, Cout, L_out_pad), jnp.float32),
        grid_spec=pltpu.PrefetchScalarGridSpec(
            num_scalar_prefetch=0,
            grid=(N,),
            in_specs=in_specs,
            out_specs=pl.BlockSpec((None, Cout, L_out_pad), lambda n: (n, 0, 0)),
            scratch_shapes=[pltpu.VMEM((G, HpWp_ext), jnp.float32),
                            pltpu.VMEM((G, L_out_pad), mm_dtype)],
        ),
        compiler_params=pltpu.CompilerParams(
            dimension_semantics=("parallel",),          # batch images across cores
            vmem_limit_bytes=vmem_limit,
        ),
    )(*args)

    # Rows are already strided in-kernel; only the column stride (and the
    # padded-width garbage columns) remain as a cheap XLA slice.
    out = out_full[:, :, :L_out].reshape(N, Cout, Ho, Wp)[
        :, :, :, 0:(Wo - 1) * sw + 1:sw]
    return out  # NCHW


# ------------------------------------------------------------------
# Deterministic parameter init (synthetic, no checkpoint load)
# ------------------------------------------------------------------
def init_depth_wise_params(key, in_c, out_c, groups, kernel=(3, 3)):
    ks = jax.random.split(key, 20)

    def bn_affine(kg, kb, km, kv, c):
        gamma = jax.random.uniform(kg, (c,), jnp.float32, 0.5, 1.5)
        beta = 0.1 * jax.random.normal(kb, (c,), jnp.float32)
        mean = 0.1 * jax.random.normal(km, (c,), jnp.float32)
        var = jax.random.uniform(kv, (c,), jnp.float32, 0.5, 1.5)
        scale = gamma / jnp.sqrt(var + 1e-5)
        bias = beta - mean * scale
        return scale, bias

    p = {}
    p["w1"] = 0.1 * jax.random.normal(ks[0], (in_c, groups), jnp.float32)        # (Cin, G)
    p["bn1_scale"], p["bn1_bias"] = bn_affine(ks[1], ks[2], ks[3], ks[4], groups)
    p["prelu1"] = jax.random.uniform(ks[5], (groups,), jnp.float32, 0.05, 0.3)
    p["wdw"] = 0.1 * jax.random.normal(ks[6], (kernel[0], kernel[1], groups), jnp.float32)
    p["bn2_scale"], p["bn2_bias"] = bn_affine(ks[7], ks[8], ks[9], ks[10], groups)
    p["prelu2"] = jax.random.uniform(ks[11], (groups,), jnp.float32, 0.05, 0.3)
    p["w3"] = 0.1 * jax.random.normal(ks[12], (groups, out_c), jnp.float32)       # (G, Cout)
    p["bn3_scale"], p["bn3_bias"] = bn_affine(ks[13], ks[14], ks[15], ks[16], out_c)
    return p


# ------------------------------------------------------------------
# Pure-JAX reference (lax convolutions) for correctness checking
# ------------------------------------------------------------------
def reference_forward(x, params, *, stride, padding, residual):
    dn = ("NCHW", "OIHW", "NCHW")
    Cin = x.shape[1]
    KH, KW, G = params["wdw"].shape
    Cout = params["w3"].shape[1]
    w1 = jnp.transpose(params["w1"], (1, 0)).reshape(G, Cin, 1, 1)
    wdw = jnp.transpose(params["wdw"], (2, 0, 1)).reshape(G, 1, KH, KW)
    w3 = jnp.transpose(params["w3"], (1, 0)).reshape(Cout, G, 1, 1)

    def bn(y, s, b):
        return y * s[None, :, None, None] + b[None, :, None, None]

    def prelu(y, a):
        return jnp.where(y >= 0, y, a[None, :, None, None] * y)

    y = lax.conv_general_dilated(x, w1, (1, 1), "VALID", dimension_numbers=dn)
    y = prelu(bn(y, params["bn1_scale"], params["bn1_bias"]), params["prelu1"])
    y = lax.conv_general_dilated(
        y, wdw, stride, [(padding[0], padding[0]), (padding[1], padding[1])],
        dimension_numbers=dn, feature_group_count=G)
    y = prelu(bn(y, params["bn2_scale"], params["bn2_bias"]), params["prelu2"])
    y = lax.conv_general_dilated(y, w3, (1, 1), "VALID", dimension_numbers=dn)
    y = bn(y, params["bn3_scale"], params["bn3_bias"])
    if residual:
        y = x + y
    return y


if __name__ == "__main__":
    key = jax.random.PRNGKey(0)
    kx1, kx2, kp1, kp2 = jax.random.split(key, 4)

    # Config 1: default Depth_Wise (kernel 3x3, stride 2, pad 1, residual=False), f32
    N, Cin, H, W = 2, 4, 16, 16
    G, Cout = 8, 8
    x1 = jax.random.normal(kx1, (N, Cin, H, W), jnp.float32)
    params1 = init_depth_wise_params(kp1, Cin, Cout, G)
    out1 = depth_wise_forward(x1, params1, stride=(2, 2), padding=(1, 1), residual=False)
    jax.block_until_ready(out1)
    ref1 = reference_forward(x1, params1, stride=(2, 2), padding=(1, 1), residual=False)
    np.testing.assert_allclose(np.asarray(out1), np.asarray(ref1), rtol=1e-4, atol=1e-4)

    # Config 2: residual variant (stride 1, in_c == out_c), f32
    Cin2 = Cout2 = 8
    G2 = 16
    x2 = jax.random.normal(kx2, (N, Cin2, H, W), jnp.float32)
    params2 = init_depth_wise_params(kp2, Cin2, Cout2, G2)
    out2 = depth_wise_forward(x2, params2, stride=(1, 1), padding=(1, 1), residual=True)
    jax.block_until_ready(out2)
    ref2 = reference_forward(x2, params2, stride=(1, 1), padding=(1, 1), residual=True)
    np.testing.assert_allclose(np.asarray(out2), np.asarray(ref2), rtol=1e-4, atol=1e-4)

    # Config 3: bf16 matmul-operand path (v6e/v7x), loose-tolerance smoke check
    out3 = depth_wise_forward(x1, params1, stride=(2, 2), padding=(1, 1),
                              residual=False, mm_dtype=jnp.bfloat16)
    jax.block_until_ready(out3)
    np.testing.assert_allclose(np.asarray(out3), np.asarray(ref1), rtol=1e-1, atol=1e-1)

    print("KERNEL_OK")
</pallas_src>

<mosaic_0001>
module attributes {stable_mosaic.version = 11 : i64} {
  func.func @kernel(%arg0: i32, %arg1: memref<1x4x256xf32, #tpu.memory_space<vmem>>, %arg2: memref<8x4xf32, #tpu.memory_space<vmem>>, %arg3: memref<8x9xf32, #tpu.memory_space<vmem>>, %arg4: memref<8x4xf32, #tpu.memory_space<vmem>>, %arg5: memref<8x8xf32, #tpu.memory_space<vmem>>, %arg6: memref<8x1xf32, #tpu.memory_space<vmem>>, %arg7: memref<1x8x256xf32, #tpu.memory_space<vmem>>, %arg8: memref<8x342xf32, #tpu.memory_space<vmem>>, %arg9: memref<8x256xf32, #tpu.memory_space<vmem>>) attributes {dimension_semantics = [#tpu.dimension_semantics<parallel>], iteration_bounds = array<i64: 2>, scalar_prefetch = 0 : i64, scratch_operands = 2 : i64, tpu.core_type = #tpu.core_type<tc>, window_params = [{transform_indices = @transform_0, window_bounds = array<i64: 1, 4, 256>}, {pipeline_mode = #tpu.pipeline_mode<synchronous>, transform_indices = @transform_1, window_bounds = array<i64: 8, 4>}, {pipeline_mode = #tpu.pipeline_mode<synchronous>, transform_indices = @transform_2, window_bounds = array<i64: 8, 9>}, {pipeline_mode = #tpu.pipeline_mode<synchronous>, transform_indices = @transform_3, window_bounds = array<i64: 8, 4>}, {pipeline_mode = #tpu.pipeline_mode<synchronous>, transform_indices = @transform_4, window_bounds = array<i64: 8, 8>}, {pipeline_mode = #tpu.pipeline_mode<synchronous>, transform_indices = @transform_5, window_bounds = array<i64: 8, 1>}, {transform_indices = @transform_6, window_bounds = array<i64: 1, 8, 256>}]} {
    %c0 = arith.constant 0 : index
    %c0_0 = arith.constant 0 : index
    %0 = vector.load %arg4[%c0, %c0_0] : memref<8x4xf32, #tpu.memory_space<vmem>>, vector<8x4xf32>
    %1 = vector.extract_strided_slice %0 {offsets = [0, 0], sizes = [8, 1], strides = [1, 1]} : vector<8x4xf32> to vector<8x1xf32>
    %2 = vector.extract_strided_slice %0 {offsets = [0, 1], sizes = [8, 1], strides = [1, 1]} : vector<8x4xf32> to vector<8x1xf32>
    %3 = vector.extract_strided_slice %0 {offsets = [0, 2], sizes = [8, 1], strides = [1, 1]} : vector<8x4xf32> to vector<8x1xf32>
    %4 = vector.extract_strided_slice %0 {offsets = [0, 3], sizes = [8, 1], strides = [1, 1]} : vector<8x4xf32> to vector<8x1xf32>
    %c0_1 = arith.constant 0 : index
    %c0_2 = arith.constant 0 : index
    %5 = vector.load %arg2[%c0_1, %c0_2] : memref<8x4xf32, #tpu.memory_space<vmem>>, vector<8x4xf32>
    %c0_3 = arith.constant 0 : index
    %c0_4 = arith.constant 0 : index
    %c0_5 = arith.constant 0 : index
    %6 = vector.load %arg1[%c0_3, %c0_4, %c0_5] : memref<1x4x256xf32, #tpu.memory_space<vmem>>, vector<1x4x256xf32>
    %7 = vector.shape_cast %6 : vector<1x4x256xf32> to vector<4x256xf32>
    %cst = arith.constant dense<0.000000e+00> : vector<8x256xf32>
    %8 = tpu.matmul %5, %7, %cst {dimension_numbers = #tpu.dot_dimension_numbers<[1], [0], [0], [1], [0, 0, 1, 1], [], []>} : vector<8x4xf32>, vector<4x256xf32>, vector<8x256xf32> -> vector<8x256xf32>
    %9 = vector.broadcast %1 : vector<8x1xf32> to vector<8x256xf32>
    %10 = arith.addf %8, %9 : vector<8x256xf32>
    %cst_6 = arith.constant 0.000000e+00 : f32
    %11 = vector.broadcast %cst_6 : f32 to vector<8x256xf32>
    %12 = arith.cmpf oge, %10, %11 : vector<8x256xf32>
    %13 = vector.broadcast %2 : vector<8x1xf32> to vector<8x256xf32>
    %14 = arith.mulf %13, %10 : vector<8x256xf32>
    %15 = arith.select %12, %10, %14 : vector<8x256xi1>, vector<8x256xf32>
    %cst_7 = arith.constant 0.000000e+00 : f32
    %16 = vector.broadcast %cst_7 : f32 to vector<8x19xf32>
    %c0_8 = arith.constant 0 : index
    %c0_9 = arith.constant 0 : index
    %17 = vector.load %arg8[%c0_8, %c0_9] : memref<8x342xf32, #tpu.memory_space<vmem>>, vector<8x19xf32>
    tpu.vector_store %arg8[%c0_8, %c0_9], %16 {strides = array<i32>} : memref<8x342xf32, #tpu.memory_space<vmem>>, vector<8x19xf32>,
    %cst_10 = arith.constant 0.000000e+00 : f32
    %18 = vector.broadcast %cst_10 : f32 to vector<8x2xf32>
    %c0_11 = arith.constant 0 : index
    %c35 = arith.constant 35 : index
    %19 = vector.load %arg8[%c0_11, %c35] : memref<8x342xf32, #tpu.memory_space<vmem>>, vector<8x2xf32>
    tpu.vector_store %arg8[%c0_11, %c35], %18 {strides = array<i32>} : memref<8x342xf32, #tpu.memory_space<vmem>>, vector<8x2xf32>,
    %c0_12 = arith.constant 0 : index
    %c53 = arith.constant 53 : index
    %20 = vector.load %arg8[%c0_12, %c53] : memref<8x342xf32, #tpu.memory_space<vmem>>, vector<8x2xf32>
    tpu.vector_store %arg8[%c0_12, %c53], %18 {strides = array<i32>} : memref<8x342xf32, #tpu.memory_space<vmem>>, vector<8x2xf32>,
    %c0_13 = arith.constant 0 : index
    %c71 = arith.constant 71 : index
    %21 = vector.load %arg8[%c0_13, %c71] : memref<8x342xf32, #tpu.memory_space<vmem>>, vector<8x2xf32>
    tpu.vector_store %arg8[%c0_13, %c71], %18 {strides = array<i32>} : memref<8x342xf32, #tpu.memory_space<vmem>>, vector<8x2xf32>,
    %c0_14 = arith.constant 0 : index
    %c89 = arith.constant 89 : index
    %22 = vector.load %arg8[%c0_14, %c89] : memref<8x342xf32, #tpu.memory_space<vmem>>, vector<8x2xf32>
    tpu.vector_store %arg8[%c0_14, %c89], %18 {strides = array<i32>} : memref<8x342xf32, #tpu.memory_space<vmem>>, vector<8x2xf32>,
    %c0_15 = arith.constant 0 : index
    %c107 = arith.constant 107 : index
    %23 = vector.load %arg8[%c0_15, %c107] : memref<8x342xf32, #tpu.memory_space<vmem>>, vector<8x2xf32>
    tpu.vector_store %arg8[%c0_15, %c107], %18 {strides = array<i32>} : memref<8x342xf32, #tpu.memory_space<vmem>>, vector<8x2xf32>,
    %c0_16 = arith.constant 0 : index
    %c125 = arith.constant 125 : index
    %24 = vector.load %arg8[%c0_16, %c125] : memref<8x342xf32, #tpu.memory_space<vmem>>, vector<8x2xf32>
    tpu.vector_store %arg8[%c0_16, %c125], %18 {strides = array<i32>} : memref<8x342xf32, #tpu.memory_space<vmem>>, vector<8x2xf32>,
    %c0_17 = arith.constant 0 : index
    %c143 = arith.constant 143 : index
    %25 = vector.load %arg8[%c0_17, %c143] : memref<8x342xf32, #tpu.memory_space<vmem>>, vector<8x2xf32>
    tpu.vector_store %arg8[%c0_17, %c143], %18 {strides = array<i32>} : memref<8x342xf32, #tpu.memory_space<vmem>>, vector<8x2xf32>,
    %c0_18 = arith.constant 0 : index
    %c161 = arith.constant 161 : index
    %26 = vector.load %arg8[%c0_18, %c161] : memref<8x342xf32, #tpu.memory_space<vmem>>, vector<8x2xf32>
    tpu.vector_store %arg8[%c0_18, %c161], %18 {strides = array<i32>} : memref<8x342xf32, #tpu.memory_space<vmem>>, vector<8x2xf32>,
    %c0_19 = arith.constant 0 : index
    %c179 = arith.constant 179 : index
    %27 = vector.load %arg8[%c0_19, %c179] : memref<8x342xf32, #tpu.memory_space<vmem>>, vector<8x2xf32>
    tpu.vector_store %arg8[%c0_19, %c179], %18 {strides = array<i32>} : memref<8x342xf32, #tpu.memory_space<vmem>>, vector<8x2xf32>,
    %c0_20 = arith.constant 0 : index
    %c197 = arith.constant 197 : index
    %28 = vector.load %arg8[%c0_20, %c197] : memref<8x342xf32, #tpu.memory_space<vmem>>, vector<8x2xf32>
    tpu.vector_store %arg8[%c0_20, %c197], %18 {strides = array<i32>} : memref<8x342xf32, #tpu.memory_space<vmem>>, vector<8x2xf32>,
    %c0_21 = arith.constant 0 : index
    %c215 = arith.constant 215 : index
    %29 = vector.load %arg8[%c0_21, %c215] : memref<8x342xf32, #tpu.memory_space<vmem>>, vector<8x2xf32>
    tpu.vector_store %arg8[%c0_21, %c215], %18 {strides = array<i32>} : memref<8x342xf32, #tpu.memory_space<vmem>>, vector<8x2xf32>,
    %c0_22 = arith.constant 0 : index
    %c233 = arith.constant 233 : index
    %30 = vector.load %arg8[%c0_22, %c233] : memref<8x342xf32, #tpu.memory_space<vmem>>, vector<8x2xf32>
    tpu.vector_store %arg8[%c0_22, %c233], %18 {strides = array<i32>} : memref<8x342xf32, #tpu.memory_space<vmem>>, vector<8x2xf32>,
    %c0_23 = arith.constant 0 : index
    %c251 = arith.constant 251 : index
    %31 = vector.load %arg8[%c0_23, %c251] : memref<8x342xf32, #tpu.memory_space<vmem>>, vector<8x2xf32>
    tpu.vector_store %arg8[%c0_23, %c251], %18 {strides = array<i32>} : memref<8x342xf32, #tpu.memory_space<vmem>>, vector<8x2xf32>,
    %c0_24 = arith.constant 0 : index
    %c269 = arith.constant 269 : index
    %32 = vector.load %arg8[%c0_24, %c269] : memref<8x342xf32, #tpu.memory_space<vmem>>, vector<8x2xf32>
    tpu.vector_store %arg8[%c0_24, %c269], %18 {strides = array<i32>} : memref<8x342xf32, #tpu.memory_space<vmem>>, vector<8x2xf32>,
    %c0_25 = arith.constant 0 : index
    %c287 = arith.constant 287 : index
    %33 = vector.load %arg8[%c0_25, %c287] : memref<8x342xf32, #tpu.memory_space<vmem>>, vector<8x2xf32>
    tpu.vector_store %arg8[%c0_25, %c287], %18 {strides = array<i32>} : memref<8x342xf32, #tpu.memory_space<vmem>>, vector<8x2xf32>,
    %cst_26 = arith.constant 0.000000e+00 : f32
    %34 = vector.broadcast %cst_26 : f32 to vector<8x37xf32>
    %c0_27 = arith.constant 0 : index
    %c305 = arith.constant 305 : index
    %35 = vector.load %arg8[%c0_27, %c305] : memref<8x342xf32, #tpu.memory_space<vmem>>, vector<8x37xf32>
    tpu.vector_store %arg8[%c0_27, %c305], %34 {strides = array<i32>} : memref<8x342xf32, #tpu.memory_space<vmem>>, vector<8x37xf32>,
    %36 = vector.extract_strided_slice %15 {offsets = [0, 0], sizes = [8, 16], strides = [1, 1]} : vector<8x256xf32> to vector<8x16xf32>
    %c0_28 = arith.constant 0 : index
    %c19 = arith.constant 19 : index
    %37 = vector.load %arg8[%c0_28, %c19] : memref<8x342xf32, #tpu.memory_space<vmem>>, vector<8x16xf32>
    tpu.vector_store %arg8[%c0_28, %c19], %36 {strides = array<i32>} : memref<8x342xf32, #tpu.memory_space<vmem>>, vector<8x16xf32>,
    %38 = vector.extract_strided_slice %15 {offsets = [0, 16], sizes = [8, 16], strides = [1, 1]} : vector<8x256xf32> to vector<8x16xf32>
    %c0_29 = arith.constant 0 : index
    %c37 = arith.constant 37 : index
    %39 = vector.load %arg8[%c0_29, %c37] : memref<8x342xf32, #tpu.memory_space<vmem>>, vector<8x16xf32>
    tpu.vector_store %arg8[%c0_29, %c37], %38 {strides = array<i32>} : memref<8x342xf32, #tpu.memory_space<vmem>>, vector<8x16xf32>,
    %40 = vector.extract_strided_slice %15 {offsets = [0, 32], sizes = [8, 16], strides = [1, 1]} : vector<8x256xf32> to vector<8x16xf32>
    %c0_30 = arith.constant 0 : index
    %c55 = arith.constant 55 : index
    %41 = vector.load %arg8[%c0_30, %c55] : memref<8x342xf32, #tpu.memory_space<vmem>>, vector<8x16xf32>
    tpu.vector_store %arg8[%c0_30, %c55], %40 {strides = array<i32>} : memref<8x342xf32, #tpu.memory_space<vmem>>, vector<8x16xf32>,
    %42 = vector.extract_strided_slice %15 {offsets = [0, 48], sizes = [8, 16], strides = [1, 1]} : vector<8x256xf32> to vector<8x16xf32>
    %c0_31 = arith.constant 0 : index
    %c73 = arith.constant 73 : index
    %43 = vector.load %arg8[%c0_31, %c73] : memref<8x342xf32, #tpu.memory_space<vmem>>, vector<8x16xf32>
    tpu.vector_store %arg8[%c0_31, %c73], %42 {strides = array<i32>} : memref<8x342xf32, #tpu.memory_space<vmem>>, vector<8x16xf32>,
    %44 = vector.extract_strided_slice %15 {offsets = [0, 64], sizes = [8, 16], strides = [1, 1]} : vector<8x256xf32> to vector<8x16xf32>
    %c0_32 = arith.constant 0 : index
    %c91 = arith.constant 91 : index
    %45 = vector.load %arg8[%c0_32, %c91] : memref<8x342xf32, #tpu.memory_space<vmem>>, vector<8x16xf32>
    tpu.vector_store %arg8[%c0_32, %c91], %44 {strides = array<i32>} : memref<8x342xf32, #tpu.memory_space<vmem>>, vector<8x16xf32>,
    %46 = vector.extract_strided_slice %15 {offsets = [0, 80], sizes = [8, 16], strides = [1, 1]} : vector<8x256xf32> to vector<8x16xf32>
    %c0_33 = arith.constant 0 : index
    %c109 = arith.constant 109 : index
    %47 = vector.load %arg8[%c0_33, %c109] : memref<8x342xf32, #tpu.memory_space<vmem>>, vector<8x16xf32>
    tpu.vector_store %arg8[%c0_33, %c109], %46 {strides = array<i32>} : memref<8x342xf32, #tpu.memory_space<vmem>>, vector<8x16xf32>,
    %48 = vector.extract_strided_slice %15 {offsets = [0, 96], sizes = [8, 16], strides = [1, 1]} : vector<8x256xf32> to vector<8x16xf32>
    %c0_34 = arith.constant 0 : index
    %c127 = arith.constant 127 : index
    %49 = vector.load %arg8[%c0_34, %c127] : memref<8x342xf32, #tpu.memory_space<vmem>>, vector<8x16xf32>
    tpu.vector_store %arg8[%c0_34, %c127], %48 {strides = array<i32>} : memref<8x342xf32, #tpu.memory_space<vmem>>, vector<8x16xf32>,
    %50 = vector.extract_strided_slice %15 {offsets = [0, 112], sizes = [8, 16], strides = [1, 1]} : vector<8x256xf32> to vector<8x16xf32>
    %c0_35 = arith.constant 0 : index
    %c145 = arith.constant 145 : index
    %51 = vector.load %arg8[%c0_35, %c145] : memref<8x342xf32, #tpu.memory_space<vmem>>, vector<8x16xf32>
    tpu.vector_store %arg8[%c0_35, %c145], %50 {strides = array<i32>} : memref<8x342xf32, #tpu.memory_space<vmem>>, vector<8x16xf32>,
    %52 = vector.extract_strided_slice %15 {offsets = [0, 128], sizes = [8, 16], strides = [1, 1]} : vector<8x256xf32> to vector<8x16xf32>
    %c0_36 = arith.constant 0 : index
    %c163 = arith.constant 163 : index
    %53 = vector.load %arg8[%c0_36, %c163] : memref<8x342xf32, #tpu.memory_space<vmem>>, vector<8x16xf32>
    tpu.vector_store %arg8[%c0_36, %c163], %52 {strides = array<i32>} : memref<8x342xf32, #tpu.memory_space<vmem>>, vector<8x16xf32>,
    %54 = vector.extract_strided_slice %15 {offsets = [0, 144], sizes = [8, 16], strides = [1, 1]} : vector<8x256xf32> to vector<8x16xf32>
    %c0_37 = arith.constant 0 : index
    %c181 = arith.constant 181 : index
    %55 = vector.load %arg8[%c0_37, %c181] : memref<8x342xf32, #tpu.memory_space<vmem>>, vector<8x16xf32>
    tpu.vector_store %arg8[%c0_37, %c181], %54 {strides = array<i32>} : memref<8x342xf32, #tpu.memory_space<vmem>>, vector<8x16xf32>,
    %56 = vector.extract_strided_slice %15 {offsets = [0, 160], sizes = [8, 16], strides = [1, 1]} : vector<8x256xf32> to vector<8x16xf32>
    %c0_38 = arith.constant 0 : index
    %c199 = arith.constant 199 : index
    %57 = vector.load %arg8[%c0_38, %c199] : memref<8x342xf32, #tpu.memory_space<vmem>>, vector<8x16xf32>
    tpu.vector_store %arg8[%c0_38, %c199], %56 {strides = array<i32>} : memref<8x342xf32, #tpu.memory_space<vmem>>, vector<8x16xf32>,
    %58 = vector.extract_strided_slice %15 {offsets = [0, 176], sizes = [8, 16], strides = [1, 1]} : vector<8x256xf32> to vector<8x16xf32>
    %c0_39 = arith.constant 0 : index
    %c217 = arith.constant 217 : index
    %59 = vector.load %arg8[%c0_39, %c217] : memref<8x342xf32, #tpu.memory_space<vmem>>, vector<8x16xf32>
    tpu.vector_store %arg8[%c0_39, %c217], %58 {strides = array<i32>} : memref<8x342xf32, #tpu.memory_space<vmem>>, vector<8x16xf32>,
    %60 = vector.extract_strided_slice %15 {offsets = [0, 192], sizes = [8, 16], strides = [1, 1]} : vector<8x256xf32> to vector<8x16xf32>
    %c0_40 = arith.constant 0 : index
    %c235 = arith.constant 235 : index
    %61 = vector.load %arg8[%c0_40, %c235] : memref<8x342xf32, #tpu.memory_space<vmem>>, vector<8x16xf32>
    tpu.vector_store %arg8[%c0_40, %c235], %60 {strides = array<i32>} : memref<8x342xf32, #tpu.memory_space<vmem>>, vector<8x16xf32>,
    %62 = vector.extract_strided_slice %15 {offsets = [0, 208], sizes = [8, 16], strides = [1, 1]} : vector<8x256xf32> to vector<8x16xf32>
    %c0_41 = arith.constant 0 : index
    %c253 = arith.constant 253 : index
    %63 = vector.load %arg8[%c0_41, %c253] : memref<8x342xf32, #tpu.memory_space<vmem>>, vector<8x16xf32>
    tpu.vector_store %arg8[%c0_41, %c253], %62 {strides = array<i32>} : memref<8x342xf32, #tpu.memory_space<vmem>>, vector<8x16xf32>,
    %64 = vector.extract_strided_slice %15 {offsets = [0, 224], sizes = [8, 16], strides = [1, 1]} : vector<8x256xf32> to vector<8x16xf32>
    %c0_42 = arith.constant 0 : index
    %c271 = arith.constant 271 : index
    %65 = vector.load %arg8[%c0_42, %c271] : memref<8x342xf32, #tpu.memory_space<vmem>>, vector<8x16xf32>
    tpu.vector_store %arg8[%c0_42, %c271], %64 {strides = array<i32>} : memref<8x342xf32, #tpu.memory_space<vmem>>, vector<8x16xf32>,
    %66 = vector.extract_strided_slice %15 {offsets = [0, 240], sizes = [8, 16], strides = [1, 1]} : vector<8x256xf32> to vector<8x16xf32>
    %c0_43 = arith.constant 0 : index
    %c289 = arith.constant 289 : index
    %67 = vector.load %arg8[%c0_43, %c289] : memref<8x342xf32, #tpu.memory_space<vmem>>, vector<8x16xf32>
    tpu.vector_store %arg8[%c0_43, %c289], %66 {strides = array<i32>} : memref<8x342xf32, #tpu.memory_space<vmem>>, vector<8x16xf32>,
    %c0_44 = arith.constant 0 : index
    %c0_45 = arith.constant 0 : index
    %68 = vector.load %arg3[%c0_44, %c0_45] : memref<8x9xf32, #tpu.memory_space<vmem>>, vector<8x9xf32>
    %c0_46 = arith.constant 0 : index
    %c0_47 = arith.constant 0 : index
    %69 = vector.load %arg8[%c0_46, %c0_47] : memref<8x342xf32, #tpu.memory_space<vmem>>, vector<8x288xf32>
    %70 = vector.extract_strided_slice %68 {offsets = [0, 0], sizes = [8, 1], strides = [1, 1]} : vector<8x9xf32> to vector<8x1xf32>
    %71 = vector.broadcast %70 : vector<8x1xf32> to vector<8x288xf32>
    %72 = arith.mulf %69, %71 : vector<8x288xf32>
    %c0_48 = arith.constant 0 : index
    %c1 = arith.constant 1 : index
    %73 = vector.load %arg8[%c0_48, %c1] : memref<8x342xf32, #tpu.memory_space<vmem>>, vector<8x288xf32>
    %74 = vector.extract_strided_slice %68 {offsets = [0, 1], sizes = [8, 1], strides = [1, 1]} : vector<8x9xf32> to vector<8x1xf32>
    %75 = vector.broadcast %74 : vector<8x1xf32> to vector<8x288xf32>
    %76 = arith.mulf %73, %75 : vector<8x288xf32>
    %77 = arith.addf %72, %76 : vector<8x288xf32>
    %c0_49 = arith.constant 0 : index
    %c2 = arith.constant 2 : index
    %78 = vector.load %arg8[%c0_49, %c2] : memref<8x342xf32, #tpu.memory_space<vmem>>, vector<8x288xf32>
    %79 = vector.extract_strided_slice %68 {offsets = [0, 2], sizes = [8, 1], strides = [1, 1]} : vector<8x9xf32> to vector<8x1xf32>
    %80 = vector.broadcast %79 : vector<8x1xf32> to vector<8x288xf32>
    %81 = arith.mulf %78, %80 : vector<8x288xf32>
    %82 = arith.addf %77, %81 : vector<8x288xf32>
    %c0_50 = arith.constant 0 : index
    %c18 = arith.constant 18 : index
    %83 = vector.load %arg8[%c0_50, %c18] : memref<8x342xf32, #tpu.memory_space<vmem>>, vector<8x288xf32>
    %84 = vector.extract_strided_slice %68 {offsets = [0, 3], sizes = [8, 1], strides = [1, 1]} : vector<8x9xf32> to vector<8x1xf32>
    %85 = vector.broadcast %84 : vector<8x1xf32> to vector<8x288xf32>
    %86 = arith.mulf %83, %85 : vector<8x288xf32>
    %87 = arith.addf %82, %86 : vector<8x288xf32>
    %c0_51 = arith.constant 0 : index
    %c19_52 = arith.constant 19 : index
    %88 = vector.load %arg8[%c0_51, %c19_52] : memref<8x342xf32, #tpu.memory_space<vmem>>, vector<8x288xf32>
    %89 = vector.extract_strided_slice %68 {offsets = [0, 4], sizes = [8, 1], strides = [1, 1]} : vector<8x9xf32> to vector<8x1xf32>
    %90 = vector.broadcast %89 : vector<8x1xf32> to vector<8x288xf32>
    %91 = arith.mulf %88, %90 : vector<8x288xf32>
    %92 = arith.addf %87, %91 : vector<8x288xf32>
    %c0_53 = arith.constant 0 : index
    %c20 = arith.constant 20 : index
    %93 = vector.load %arg8[%c0_53, %c20] : memref<8x342xf32, #tpu.memory_space<vmem>>, vector<8x288xf32>
    %94 = vector.extract_strided_slice %68 {offsets = [0, 5], sizes = [8, 1], strides = [1, 1]} : vector<8x9xf32> to vector<8x1xf32>
    %95 = vector.broadcast %94 : vector<8x1xf32> to vector<8x288xf32>
    %96 = arith.mulf %93, %95 : vector<8x288xf32>
    %97 = arith.addf %92, %96 : vector<8x288xf32>
    %c0_54 = arith.constant 0 : index
    %c36 = arith.constant 36 : index
    %98 = vector.load %arg8[%c0_54, %c36] : memref<8x342xf32, #tpu.memory_space<vmem>>, vector<8x288xf32>
    %99 = vector.extract_strided_slice %68 {offsets = [0, 6], sizes = [8, 1], strides = [1, 1]} : vector<8x9xf32> to vector<8x1xf32>
    %100 = vector.broadcast %99 : vector<8x1xf32> to vector<8x288xf32>
    %101 = arith.mulf %98, %100 : vector<8x288xf32>
    %102 = arith.addf %97, %101 : vector<8x288xf32>
    %c0_55 = arith.constant 0 : index
    %c37_56 = arith.constant 37 : index
    %103 = vector.load %arg8[%c0_55, %c37_56] : memref<8x342xf32, #tpu.memory_space<vmem>>, vector<8x288xf32>
    %104 = vector.extract_strided_slice %68 {offsets = [0, 7], sizes = [8, 1], strides = [1, 1]} : vector<8x9xf32> to vector<8x1xf32>
    %105 = vector.broadcast %104 : vector<8x1xf32> to vector<8x288xf32>
    %106 = arith.mulf %103, %105 : vector<8x288xf32>
    %107 = arith.addf %102, %106 : vector<8x288xf32>
    %c0_57 = arith.constant 0 : index
    %c38 = arith.constant 38 : index
    %108 = vector.load %arg8[%c0_57, %c38] : memref<8x342xf32, #tpu.memory_space<vmem>>, vector<8x288xf32>
    %109 = vector.extract_strided_slice %68 {offsets = [0, 8], sizes = [8, 1], strides = [1, 1]} : vector<8x9xf32> to vector<8x1xf32>
    %110 = vector.broadcast %109 : vector<8x1xf32> to vector<8x288xf32>
    %111 = arith.mulf %108, %110 : vector<8x288xf32>
    %112 = arith.addf %107, %111 : vector<8x288xf32>
    %113 = vector.broadcast %3 : vector<8x1xf32> to vector<8x288xf32>
    %114 = arith.addf %112, %113 : vector<8x288xf32>
    %cst_58 = arith.constant 0.000000e+00 : f32
    %115 = vector.broadcast %cst_58 : f32 to vector<8x288xf32>
    %116 = arith.cmpf oge, %114, %115 : vector<8x288xf32>
    %117 = vector.broadcast %4 : vector<8x1xf32> to vector<8x288xf32>
    %118 = arith.mulf %117, %114 : vector<8x288xf32>
    %119 = arith.select %116, %114, %118 : vector<8x288xi1>, vector<8x288xf32>
    %120 = vector.extract_strided_slice %119 {offsets = [0, 0], sizes = [8, 18], strides = [1, 1]} : vector<8x288xf32> to vector<8x18xf32>
    %c0_59 = arith.constant 0 : index
    %c0_60 = arith.constant 0 : index
    %121 = vector.load %arg9[%c0_59, %c0_60] : memref<8x256xf32, #tpu.memory_space<vmem>>, vector<8x18xf32>
    tpu.vector_store %arg9[%c0_59, %c0_60], %120 {strides = array<i32>} : memref<8x256xf32, #tpu.memory_space<vmem>>, vector<8x18xf32>,
    %122 = vector.extract_strided_slice %119 {offsets = [0, 36], sizes = [8, 18], strides = [1, 1]} : vector<8x288xf32> to vector<8x18xf32>
    %c0_61 = arith.constant 0 : index
    %c18_62 = arith.constant 18 : index
    %123 = vector.load %arg9[%c0_61, %c18_62] : memref<8x256xf32, #tpu.memory_space<vmem>>, vector<8x18xf32>
    tpu.vector_store %arg9[%c0_61, %c18_62], %122 {strides = array<i32>} : memref<8x256xf32, #tpu.memory_space<vmem>>, vector<8x18xf32>,
    %124 = vector.extract_strided_slice %119 {offsets = [0, 72], sizes = [8, 18], strides = [1, 1]} : vector<8x288xf32> to vector<8x18xf32>
    %c0_63 = arith.constant 0 : index
    %c36_64 = arith.constant 36 : index
    %125 = vector.load %arg9[%c0_63, %c36_64] : memref<8x256xf32, #tpu.memory_space<vmem>>, vector<8x18xf32>
    tpu.vector_store %arg9[%c0_63, %c36_64], %124 {strides = array<i32>} : memref<8x256xf32, #tpu.memory_space<vmem>>, vector<8x18xf32>,
    %126 = vector.extract_strided_slice %119 {offsets = [0, 108], sizes = [8, 18], strides = [1, 1]} : vector<8x288xf32> to vector<8x18xf32>
    %c0_65 = arith.constant 0 : index
    %c54 = arith.constant 54 : index
    %127 = vector.load %arg9[%c0_65, %c54] : memref<8x256xf32, #tpu.memory_space<vmem>>, vector<8x18xf32>
    tpu.vector_store %arg9[%c0_65, %c54], %126 {strides = array<i32>} : memref<8x256xf32, #tpu.memory_space<vmem>>, vector<8x18xf32>,
    %128 = vector.extract_strided_slice %119 {offsets = [0, 144], sizes = [8, 18], strides = [1, 1]} : vector<8x288xf32> to vector<8x18xf32>
    %c0_66 = arith.constant 0 : index
    %c72 = arith.constant 72 : index
    %129 = vector.load %arg9[%c0_66, %c72] : memref<8x256xf32, #tpu.memory_space<vmem>>, vector<8x18xf32>
    tpu.vector_store %arg9[%c0_66, %c72], %128 {strides = array<i32>} : memref<8x256xf32, #tpu.memory_space<vmem>>, vector<8x18xf32>,
    %130 = vector.extract_strided_slice %119 {offsets = [0, 180], sizes = [8, 18], strides = [1, 1]} : vector<8x288xf32> to vector<8x18xf32>
    %c0_67 = arith.constant 0 : index
    %c90 = arith.constant 90 : index
    %131 = vector.load %arg9[%c0_67, %c90] : memref<8x256xf32, #tpu.memory_space<vmem>>, vector<8x18xf32>
    tpu.vector_store %arg9[%c0_67, %c90], %130 {strides = array<i32>} : memref<8x256xf32, #tpu.memory_space<vmem>>, vector<8x18xf32>,
    %132 = vector.extract_strided_slice %119 {offsets = [0, 216], sizes = [8, 18], strides = [1, 1]} : vector<8x288xf32> to vector<8x18xf32>
    %c0_68 = arith.constant 0 : index
    %c108 = arith.constant 108 : index
    %133 = vector.load %arg9[%c0_68, %c108] : memref<8x256xf32, #tpu.memory_space<vmem>>, vector<8x18xf32>
    tpu.vector_store %arg9[%c0_68, %c108], %132 {strides = array<i32>} : memref<8x256xf32, #tpu.memory_space<vmem>>, vector<8x18xf32>,
    %134 = vector.extract_strided_slice %119 {offsets = [0, 252], sizes = [8, 18], strides = [1, 1]} : vector<8x288xf32> to vector<8x18xf32>
    %c0_69 = arith.constant 0 : index
    %c126 = arith.constant 126 : index
    %135 = vector.load %arg9[%c0_69, %c126] : memref<8x256xf32, #tpu.memory_space<vmem>>, vector<8x18xf32>
    tpu.vector_store %arg9[%c0_69, %c126], %134 {strides = array<i32>} : memref<8x256xf32, #tpu.memory_space<vmem>>, vector<8x18xf32>,
    %cst_70 = arith.constant 0.000000e+00 : f32
    %136 = vector.broadcast %cst_70 : f32 to vector<8x112xf32>
    %c0_71 = arith.constant 0 : index
    %c144 = arith.constant 144 : index
    %137 = vector.load %arg9[%c0_71, %c144] : memref<8x256xf32, #tpu.memory_space<vmem>>, vector<8x112xf32>
    tpu.vector_store %arg9[%c0_71, %c144], %136 {strides = array<i32>} : memref<8x256xf32, #tpu.memory_space<vmem>>, vector<8x112xf32>,
    %c0_72 = arith.constant 0 : index
    %c0_73 = arith.constant 0 : index
    %138 = vector.load %arg5[%c0_72, %c0_73] : memref<8x8xf32, #tpu.memory_space<vmem>>, vector<8x8xf32>
    %c0_74 = arith.constant 0 : index
    %c0_75 = arith.constant 0 : index
    %139 = vector.load %arg9[%c0_74, %c0_75] : memref<8x256xf32, #tpu.memory_space<vmem>>, vector<8x256xf32>
    %cst_76 = arith.constant dense<0.000000e+00> : vector<8x256xf32>
    %140 = tpu.matmul %138, %139, %cst_76 {dimension_numbers = #tpu.dot_dimension_numbers<[1], [0], [0], [1], [0, 0, 1, 1], [], []>} : vector<8x8xf32>, vector<8x256xf32>, vector<8x256xf32> -> vector<8x256xf32>
    %c0_77 = arith.constant 0 : index
    %c0_78 = arith.constant 0 : index
    %141 = vector.load %arg6[%c0_77, %c0_78] : memref<8x1xf32, #tpu.memory_space<vmem>>, vector<8x1xf32>
    %142 = vector.broadcast %141 : vector<8x1xf32> to vector<8x256xf32>
    %143 = arith.addf %140, %142 : vector<8x256xf32>
    %c0_79 = arith.constant 0 : index
    %c0_80 = arith.constant 0 : index
    %c0_81 = arith.constant 0 : index
    %144 = vector.load %arg7[%c0_79, %c0_80, %c0_81] : memref<1x8x256xf32, #tpu.memory_space<vmem>>, vector<1x8x256xf32>
    %145 = vector.shape_cast %144 : vector<1x8x256xf32> to vector<8x256xf32>
    %146 = vector.shape_cast %143 : vector<8x256xf32> to vector<1x8x256xf32>
    tpu.vector_store %arg7[%c0_79, %c0_80, %c0_81], %146 {strides = array<i32>} : memref<1x8x256xf32, #tpu.memory_space<vmem>>, vector<1x8x256xf32>,
    return
  }
  func.func @transform_0(%arg0: i32) -> (i32, i32, i32) {
    %c0_i32 = arith.constant 0 : i32
    %c0_i32_0 = arith.constant 0 : i32
    %c0_i32_1 = arith.constant 0 : i32
    return %arg0, %c0_i32, %c0_i32_0 : i32, i32, i32
  }
  func.func @transform_1(%arg0: i32) -> (i32, i32) {
    %c0_i32 = arith.constant 0 : i32
    %c0_i32_0 = arith.constant 0 : i32
    %c0_i32_1 = arith.constant 0 : i32
    return %c0_i32, %c0_i32_0 : i32, i32
  }
  func.func @transform_2(%arg0: i32) -> (i32, i32) {
    %c0_i32 = arith.constant 0 : i32
    %c0_i32_0 = arith.constant 0 : i32
    %c0_i32_1 = arith.constant 0 : i32
    return %c0_i32, %c0_i32_0 : i32, i32
  }
  func.func @transform_3(%arg0: i32) -> (i32, i32) {
    %c0_i32 = arith.constant 0 : i32
    %c0_i32_0 = arith.constant 0 : i32
    %c0_i32_1 = arith.constant 0 : i32
    return %c0_i32, %c0_i32_0 : i32, i32
  }
  func.func @transform_4(%arg0: i32) -> (i32, i32) {
    %c0_i32 = arith.constant 0 : i32
    %c0_i32_0 = arith.constant 0 : i32
    %c0_i32_1 = arith.constant 0 : i32
    return %c0_i32, %c0_i32_0 : i32, i32
  }
  func.func @transform_5(%arg0: i32) -> (i32, i32) {
    %c0_i32 = arith.constant 0 : i32
    %c0_i32_0 = arith.constant 0 : i32
    %c0_i32_1 = arith.constant 0 : i32
    return %c0_i32, %c0_i32_0 : i32, i32
  }
  func.func @transform_6(%arg0: i32) -> (i32, i32, i32) {
    %c0_i32 = arith.constant 0 : i32
    %c0_i32_0 = arith.constant 0 : i32
    %c0_i32_1 = arith.constant 0 : i32
    return %arg0, %c0_i32, %c0_i32_0 : i32, i32, i32
  }
}

</mosaic_0001>

<llo_original>
// kernel: tpu_custom_call.1
$region0: #{tpu_custom_call.1}
  #allocation0 [shape = 'u32[]', space=smem, size = 0x4, offset = 0x4, fixed_abs, tag = 'smem constant byte address 0x4 - core index']
  #allocation1 [shape = 'u32[72,128]{1,0:T(1,128)}', space=vmem, size = 0x9000, scoped, tag = 'internal scratch']
  #allocation2 [shape = 'f32[8,342]{1,0:T(8,128)}', space=vmem, size = 0x3000, scoped, tag = 'scratch operand']
  #allocation3 [shape = 'f32[8,256]{1,0:T(8,128)}', space=vmem, size = 0x2000, scoped, tag = 'scratch operand']
  %s0 = inlined_call_operand.vmem [shape: f32[2,4,256], index: 0, kind: input, shape index: {}]
  %s1 = inlined_call_operand.vmem [shape: f32[8,4], index: 1, kind: input, shape index: {}]
  %s2 = inlined_call_operand.vmem [shape: f32[8,9], index: 2, kind: input, shape index: {}]
  %s3 = inlined_call_operand.vmem [shape: f32[8,4], index: 3, kind: input, shape index: {}]
  %s4 = inlined_call_operand.hbm [shape: f32[8,8], index: 4, kind: input, shape index: {}]
  %s5 = inlined_call_operand.vmem [shape: f32[8,1], index: 5, kind: input, shape index: {}]
  %s6 = inlined_call_operand.hbm [shape: f32[2,8,256], index: 6, kind: output, shape index: {}]
  %s7 = sld [smem:[#allocation0]]
  $region61: #{tpu_custom_call.1} parent=0
    _
  %s9 = ssub.s32 1, %s7
  %s10 = scalar_select 0, %s9, %s7
  $region1: #{tpu_custom_call.1} parent=0
    #allocation4 [shape = 'u8[4096]{0}', space=vmem, size = 0x1000, scoped, tag = 'input window, operand 4, single buffered']
    #allocation5 [shape = 's32[2]{0}', space=sflag, size = 0x8, scoped, tag = 'scoped memory for tpu_custom_call.1']
    #allocation6 [shape = 's32[2]{0}', space=sflag, size = 0x8, scoped, tag = 'scoped memory for tpu_custom_call.1']
    #allocation7 [shape = 'u8[16384]{0}', space=vmem, size = 0x4000, scoped, tag = 'output window, operand 0']
    %11 = vsyncpa [#allocation5], 0
    %12 = vsyncpa [#allocation6], 0
    %s13 = scalar_lea.sflag [#allocation6], 1
    %14 = vsyncpa %s13, 0
    loop: start=0, step=1, limit=4
    $region2: #{tpu_custom_call.1} parent=1 // loop_pre_header
      _
    $region3: #{tpu_custom_call.1} parent=1 // loop_header
      %s16 = sphi 0, %s20
      %p17 = scmp.ge.s32.totalorder %s16, 4
      %s26 = sphi 0, %s28
      %s29 = sphi 0, %s26
      %s30 = sphi 0, %s29
      %s46 = sphi 0, %s30
      %s50 = sphi 0, %s50
      %s52 = sphi 0, %s50
      %s53 = sphi 0, %s52
      %s67 = sphi 0, %s53
      %s71 = sphi 0, %s71
      %s73 = sphi 0, %s71
      %s74 = sphi 0, %s73
      %s88 = sphi 0, %s74
      %s92 = sphi 0, %s92
      %s94 = sphi 0, %s92
      %s95 = sphi 0, %s94
      %s109 = sphi 0, %s95
      %s113 = sphi 0, %s113
      %s115 = sphi 0, %s113
      %s116 = sphi 0, %s115
      %s130 = sphi 0, %s116
      %s134 = sphi 0, %s134
      %s136 = sphi 0, %s134
      %s137 = sphi 0, %s136
      %s151 = sphi 0, %s137
      %s157 = sphi 0, %s159
      %s160 = sphi 0, %s157
      %s161 = sphi 0, %s160
      %s177 = sphi 0, %s161
    $region4: #{tpu_custom_call.1} parent=1 // loop_header_branch
      %19 = sbr.rel (%p17) target = $region8
    $region5: #{tpu_custom_call.1} parent=1 // loop_body
      %s21 = ssub.s32 %s16, 1
      %s22 = ssub.s32 %s16, 2
      %s23 = sadd.s32 %s16, 1
      %s24 = ssub.s32 %s16, %s23
      %p25 = scmp.eq.s32.totalorder %s24, 0
      %s27 = sadd.s32 %s26, 1
      %s28 = scalar_select %p25, %s26, %s27
      %p31 = pneg %p25
      %p32 = scmp.eq.s32.totalorder %s16, 1
      %p33 = por %p31, %p32
      %p34 = scmp.ne.s32.totalorder %s26, %s29
      %p35 = scmp.eq.s32.totalorder %s16, 0
      %p36 = por %p34, %p35
      %p37 = scmp.ne.s32.totalorder %s26, %s29
      %p38 = scmp.eq.s32.totalorder %s21, 1
      %p39 = por %p37, %p38
      %p40 = scmp.ne.s32.totalorder %s29, %s30
      %p41 = scmp.eq.s32.totalorder %s21, 0
      %p42 = por %p40, %p41
      %p43 = scmp.ne.s32.totalorder %s29, %s30
      %p44 = scmp.eq.s32.totalorder %s22, 1
      %p45 = por %p43, %p44
      %p47 = scmp.ne.s32.totalorder %s30, %s46
      %p48 = scmp.eq.s32.totalorder %s22, 0
      %p49 = por %p47, %p48
      %s51 = sadd.s32 %s50, 1
      %p54 = scmp.eq.s32.totalorder %s16, 1
      %p55 = scmp.ne.s32.totalorder %s50, %s52
      %p56 = scmp.eq.s32.totalorder %s16, 0
      %p57 = por %p55, %p56
      %p58 = scmp.ne.s32.totalorder %s50, %s52
      %p59 = scmp.eq.s32.totalorder %s21, 1
      %p60 = por %p58, %p59
      %p61 = scmp.ne.s32.totalorder %s52, %s53
      %p62 = scmp.eq.s32.totalorder %s21, 0
      %p63 = por %p61, %p62
      %p64 = scmp.ne.s32.totalorder %s52, %s53
      %p65 = scmp.eq.s32.totalorder %s22, 1
      %p66 = por %p64, %p65
      %p68 = scmp.ne.s32.totalorder %s53, %s67
      %p69 = scmp.eq.s32.totalorder %s22, 0
      %p70 = por %p68, %p69
      %s72 = sadd.s32 %s71, 1
      %p75 = scmp.eq.s32.totalorder %s16, 1
      %p76 = scmp.ne.s32.totalorder %s71, %s73
      %p77 = scmp.eq.s32.totalorder %s16, 0
      %p78 = por %p76, %p77
      %p79 = scmp.ne.s32.totalorder %s71, %s73
      %p80 = scmp.eq.s32.totalorder %s21, 1
      %p81 = por %p79, %p80
      %p82 = scmp.ne.s32.totalorder %s73, %s74
      %p83 = scmp.eq.s32.totalorder %s21, 0
      %p84 = por %p82, %p83
      %p85 = scmp.ne.s32.totalorder %s73, %s74
      %p86 = scmp.eq.s32.totalorder %s22, 1
      %p87 = por %p85, %p86
      %p89 = scmp.ne.s32.totalorder %s74, %s88
      %p90 = scmp.eq.s32.totalorder %s22, 0
      %p91 = por %p89, %p90
      %s93 = sadd.s32 %s92, 1
      %p96 = scmp.eq.s32.totalorder %s16, 1
      %p97 = scmp.ne.s32.totalorder %s92, %s94
      %p98 = scmp.eq.s32.totalorder %s16, 0
      %p99 = por %p97, %p98
      %p100 = scmp.ne.s32.totalorder %s92, %s94
      %p101 = scmp.eq.s32.totalorder %s21, 1
      %p102 = por %p100, %p101
      %p103 = scmp.ne.s32.totalorder %s94, %s95
      %p104 = scmp.eq.s32.totalorder %s21, 0
      %p105 = por %p103, %p104
      %p106 = scmp.ne.s32.totalorder %s94, %s95
      %p107 = scmp.eq.s32.totalorder %s22, 1
      %p108 = por %p106, %p107
      %p110 = scmp.ne.s32.totalorder %s95, %s109
      %p111 = scmp.eq.s32.totalorder %s22, 0
      %p112 = por %p110, %p111
      %s114 = sadd.s32 %s113, 1
      %p117 = scmp.eq.s32.totalorder %s16, 1
      %p118 = scmp.ne.s32.totalorder %s113, %s115
      %p119 = scmp.eq.s32.totalorder %s16, 0
      %p120 = por %p118, %p119
      %p121 = scmp.ne.s32.totalorder %s113, %s115
      %p122 = scmp.eq.s32.totalorder %s21, 1
      %p123 = por %p121, %p122
      %p124 = scmp.ne.s32.totalorder %s115, %s116
      %p125 = scmp.eq.s32.totalorder %s21, 0
      %p126 = por %p124, %p125
      %p127 = scmp.ne.s32.totalorder %s115, %s116
      %p128 = scmp.eq.s32.totalorder %s22, 1
      %p129 = por %p127, %p128
      %p131 = scmp.ne.s32.totalorder %s116, %s130
      %p132 = scmp.eq.s32.totalorder %s22, 0
      %p133 = por %p131, %p132
      %s135 = sadd.s32 %s134, 1
      %p138 = scmp.eq.s32.totalorder %s16, 1
      %p139 = scmp.ne.s32.totalorder %s134, %s136
      %p140 = scmp.eq.s32.totalorder %s16, 0
      %p141 = por %p139, %p140
      %p142 = scmp.ne.s32.totalorder %s134, %s136
      %p143 = scmp.eq.s32.totalorder %s21, 1
      %p144 = por %p142, %p143
      %p145 = scmp.ne.s32.totalorder %s136, %s137
      %p146 = scmp.eq.s32.totalorder %s21, 0
      %p147 = por %p145, %p146
      %p148 = scmp.ne.s32.totalorder %s136, %s137
      %p149 = scmp.eq.s32.totalorder %s22, 1
      %p150 = por %p148, %p149
      %p152 = scmp.ne.s32.totalorder %s137, %s151
      %p153 = scmp.eq.s32.totalorder %s22, 0
      %p154 = por %p152, %p153
      %s155 = ssub.s32 %s16, %s23
      %p156 = scmp.eq.s32.totalorder %s155, 0
      %s158 = sadd.s32 %s157, 1
      %s159 = scalar_select %p156, %s157, %s158
      %p162 = pneg %p156
      %p163 = scmp.eq.s32.totalorder %s16, 1
      %p164 = por %p162, %p163
      %p165 = scmp.ne.s32.totalorder %s157, %s160
      %p166 = scmp.eq.s32.totalorder %s16, 0
      %p167 = por %p165, %p166
      %p168 = scmp.ne.s32.totalorder %s157, %s160
      %p169 = scmp.eq.s32.totalorder %s21, 1
      %p170 = por %p168, %p169
      %p171 = scmp.ne.s32.totalorder %s160, %s161
      %p172 = scmp.eq.s32.totalorder %s21, 0
      %p173 = por %p171, %p172
      %p174 = scmp.ne.s32.totalorder %s160, %s161
      %p175 = scmp.eq.s32.totalorder %s22, 1
      %p176 = por %p174, %p175
      %p178 = scmp.ne.s32.totalorder %s161, %s177
      %p179 = scmp.eq.s32.totalorder %s22, 0
      %p180 = por %p178, %p179
      %p181 = scmp.le.s32.totalorder 1, %s16
      %p182 = scmp.lt.s32.totalorder %s16, 3
      %p183 = pnand %p181, %p182
      %p184 = pneg %p183
      // Predicated region
      $region9: #{tpu_custom_call.1} parent=5 // pred_check
        _
      $region10: #{tpu_custom_call.1} parent=5 // pred_check_branch
        %186 = sbr.rel (%p183) target = $region12
      $region11: #{tpu_custom_call.1} parent=5 // pred_region
        %s187 = ssub.s32 %s16, 1
        // Predicated region
        $region13: #{tpu_custom_call.1} parent=11 // pred_check
          %p188 = pneg %p63
        $region14: #{tpu_custom_call.1} parent=11 // pred_check_branch
          %190 = sbr.rel (%p188) target = $region16
        $region15: #{tpu_custom_call.1} parent=11 // pred_region
          _
        $region16: #{tpu_custom_call.1} parent=11 // pred_fallthru
          _
        // Predicated region
        $region17: #{tpu_custom_call.1} parent=11 // pred_check
          %p191 = pneg %p84
        $region18: #{tpu_custom_call.1} parent=11 // pred_check_branch
          %193 = sbr.rel (%p191) target = $region20
        $region19: #{tpu_custom_call.1} parent=11 // pred_region
          _
        $region20: #{tpu_custom_call.1} parent=11 // pred_fallthru
          _
        // Predicated region
        $region21: #{tpu_custom_call.1} parent=11 // pred_check
          %p194 = pneg %p105
        $region22: #{tpu_custom_call.1} parent=11 // pred_check_branch
          %196 = sbr.rel (%p194) target = $region24
        $region23: #{tpu_custom_call.1} parent=11 // pred_region
          _
        $region24: #{tpu_custom_call.1} parent=11 // pred_fallthru
          _
        // Predicated region
        $region25: #{tpu_custom_call.1} parent=11 // pred_check
          %p197 = pneg %p126
        $region26: #{tpu_custom_call.1} parent=11 // pred_check_branch
          %199 = sbr.rel (%p197) target = $region28
        $region27: #{tpu_custom_call.1} parent=11 // pred_region
          %201 = vsyncadd [#allocation5], 0
          %s203 = sshll.u32 %s4, 4
          %s204 = int_to_ptr.hbm [resolvable:$true] %s203
          %s205 = sshll.u32 [#allocation4], 4
          %s206 = int_to_ptr.vmem [resolvable:$true] %s205
          %208 = dma.hbm_to_vmem [thread:$0]  %s204, 128, %s206, [#allocation5]
        $region28: #{tpu_custom_call.1} parent=11 // pred_fallthru
          _
        // Predicated region
        $region29: #{tpu_custom_call.1} parent=11 // pred_check
          %p209 = pneg %p147
        $region30: #{tpu_custom_call.1} parent=11 // pred_check_branch
          %211 = sbr.rel (%p209) target = $region32
        $region31: #{tpu_custom_call.1} parent=11 // pred_region
          _
        $region32: #{tpu_custom_call.1} parent=11 // pred_fallthru
          _
      $region12: #{tpu_custom_call.1} parent=5 // pred_fallthru
        _
      %p212 = scmp.lt.s32.totalorder %s16, 2
      // Predicated region
      $region33: #{tpu_custom_call.1} parent=5 // pred_check
        %p213 = pneg %p212
      $region34: #{tpu_custom_call.1} parent=5 // pred_check_branch
        %215 = sbr.rel (%p213) target = $region36
      $region35: #{tpu_custom_call.1} parent=5 // pred_region
        // Predicated region
        $region37: #{tpu_custom_call.1} parent=35 // pred_check
          %p216 = pneg %p36
        $region38: #{tpu_custom_call.1} parent=35 // pred_check_branch
          %218 = sbr.rel (%p216) target = $region40
        $region39: #{tpu_custom_call.1} parent=35 // pred_region
          %p219 = scmp.lt.s32.totalorder %s16, 1
          %s220 = scalar_select %p219, %s16, 1
          %s221 = smul.addr %s220, 2
          %s222 = smul.addr %s221, 4
          %s223 = scalar_lea.vmem %s0, %s222
        $region40: #{tpu_custom_call.1} parent=35 // pred_fallthru
          _
      $region36: #{tpu_custom_call.1} parent=5 // pred_fallthru
        _
      %p224 = scmp.le.s32.totalorder 1, %s16
      %p225 = scmp.lt.s32.totalorder %s16, 3
      %p226 = pnand %p224, %p225
      %p227 = pneg %p226
      // Predicated region
      $region41: #{tpu_custom_call.1} parent=5 // pred_check
        _
      $region42: #{tpu_custom_call.1} parent=5 // pred_check_branch
        %229 = sbr.rel (%p226) target = $region44
      $region43: #{tpu_custom_call.1} parent=5 // pred_region
        %s230 = ssub.s32 %s16, 1
        // Predicated region
        $region45: #{tpu_custom_call.1} parent=43 // pred_check
          %p231 = pneg %p126
        $region46: #{tpu_custom_call.1} parent=43 // pred_check_branch
          %233 = sbr.rel (%p231) target = $region48
        $region47: #{tpu_custom_call.1} parent=43 // pred_region
          %235 = dma.done [#allocation5], 128
        $region48: #{tpu_custom_call.1} parent=43 // pred_fallthru
          _
        %p236 = scmp.lt.s32.totalorder %s21, 1
        %s237 = scalar_select %p236, %s21, 1
        %s238 = smul.addr %s237, 2
        %s239 = smul.addr %s238, 4
        %s240 = scalar_lea.vmem %s0, %s239
        %p241 = pneg %p42
        %p242 = pneg %p39
        %p243 = pneg %p63
        %p244 = pneg %p60
        %p245 = pneg %p84
        %p246 = pneg %p81
        %p247 = pneg %p105
        %p248 = pneg %p102
        %p249 = pneg %p126
        %p250 = pneg %p123
        %p251 = pneg %p147
        %p252 = pneg %p144
        %p253 = pneg %p173
        %p254 = pneg %p170
        %s255 = sand.u32 %s160, 1
        %s256 = scalar_lea.sflag [#allocation6], %s255
        %s257 = sand.u32 %s160, 1
        %s258 = smul.addr %s257, 16
        %s259 = scalar_lea.vmem [#allocation7], %s258
        %p260 = scmp.lt.s32.totalorder %s21, 1
        %s261 = scalar_select %p260, %s21, 1
        %s262 = smul.addr %s261, 2
        %s263 = smul.addr %s262, 4
        %s264 = scalar_lea.vmem %s0, %s263
        %v265 = vld [vmem:[%s3] sm:$0xff]
        %v266 = vld [vmem:[%s1] sm:$0xff]
        %v267 = vld [vmem:[%s264] sm:$0xff]
        %269 = vset.pattern.permute.xlu0 0
        %270 = vperm.xlu0 %269, %v265
        %v271 = vpop.permute.xlu0 %270
        %274 = vst [vmem:[#allocation1] ss:$2 sm:$0xff] %v267
        %v275 = vld.sshfl [vmem:[#allocation1] sm:$0xff pattern:$0x75316420]
        %v276 = vld.sshfl [vmem:[#allocation1 + $0x8] sm:$0xff pattern:$0x75316420]
        %vm277 = vcmask 31744
        %v279 = vsel %vm277, %v266, 0
        %vm281 = vcmask 1043456
        %v282 = vsel %vm281, %v275, 0
        %v284 = vsel %vm281, %v276, 0
        %286 = vmatpush.msra.mxu0 0.0
        %287 = vmatpush.msra.mxu0 0.0
        %288 = vmatpush.msra.mxu0 0.0
        %289 = vmatpush.msra.mxu0 0.0
        %290 = vmatpush.msra.mxu0 0.0
        %291 = vmatpush.msra.mxu0 0.0
        %292 = vmatpush.msra.mxu0 0.0
        %293 = vmatpush.msra.mxu0 0.0
        %294 = vmatpush.msra.mxu0 0.0
        %295 = vmatpush.msra.mxu0 0.0
        %296 = vmatpush.msra.mxu0 0.0
        %297 = vmatpush.msra.mxu0 0.0
        %298 = vmatpush.msra.mxu0 0.0
        %299 = vmatpush.msra.mxu0 0.0
        %300 = vmatpush.msra.mxu0 0.0
        %301 = vmatpush.msra.mxu0 %v282
        %302 = vmatmul.f32.gmra.mxu0 %v279
        %v303 = vpop.f32.mrf.mxu0
        %v304 = vadd.f32 %v271, %v303
        %305 = vdwg.mxu0
        %306 = vmatpush.msra.mxu0 0.0
        %307 = vmatpush.msra.mxu0 0.0
        %308 = vmatpush.msra.mxu0 0.0
        %309 = vmatpush.msra.mxu0 0.0
        %310 = vmatpush.msra.mxu0 0.0
        %311 = vmatpush.msra.mxu0 0.0
        %312 = vmatpush.msra.mxu0 0.0
        %313 = vmatpush.msra.mxu0 0.0
        %314 = vmatpush.msra.mxu0 0.0
        %315 = vmatpush.msra.mxu0 0.0
        %316 = vmatpush.msra.mxu0 0.0
        %317 = vmatpush.msra.mxu0 0.0
        %318 = vmatpush.msra.mxu0 0.0
        %319 = vmatpush.msra.mxu0 0.0
        %320 = vmatpush.msra.mxu0 0.0
        %321 = vmatpush.msra.mxu0 %v284
        %322 = vmatmul.f32.gmra.mxu0 %v279
        %v323 = vpop.f32.mrf.mxu0
        %v324 = vadd.f32 %v271, %v323
        %325 = vdwg.mxu0
        %vm326 = vcmp.ge.f32.partialorder %v304, 0.0
        %vm327 = vcmp.ge.f32.partialorder %v324, 0.0
        %328 = vset.pattern.permute.xlu0 1
        %329 = vperm.xlu0 %328, %v265
        %v330 = vpop.permute.xlu0 %329
        %v332 = vmul.f32 %v330, %v304
        %v333 = vmul.f32 %v330, %v324
        %v334 = vsel %vm326, %v304, %v332
        %v335 = vsel %vm327, %v324, %v333
        %vm336 = vcmask 154624
        %337 = vst.msk [vmem:[#allocation2] sm:$0xff] %vm336, 0.0
        %vm338 = vcmask 302360
        %339 = vst.msk [vmem:[#allocation2] sm:$0xff] %vm338, 0.0
        %vm340 = vcmask 449960
        %341 = vst.msk [vmem:[#allocation2] sm:$0xff] %vm340, 0.0
        %vm342 = vcmask 597560
        %343 = vst.msk [vmem:[#allocation2] sm:$0xff] %vm342, 0.0
        %vm344 = vcmask 745160
        %345 = vst.msk [vmem:[#allocation2] sm:$0xff] %vm344, 0.0
        %vm346 = vcmask 892760
        %347 = vst.msk [vmem:[#allocation2] sm:$0xff] %vm346, 0.0
        %vm348 = vcmask 1040360
        %349 = vst.msk [vmem:[#allocation2] sm:$0xff] %vm348, 0.0
        %vm350 = vcmask 138360
        %351 = vst.msk [vmem:[#allocation2 + $0x8] sm:$0xff] %vm350, 0.0
        %vm352 = vcmask 285960
        %353 = vst.msk [vmem:[#allocation2 + $0x8] sm:$0xff] %vm352, 0.0
        %vm354 = vcmask 433560
        %355 = vst.msk [vmem:[#allocation2 + $0x8] sm:$0xff] %vm354, 0.0
        %vm356 = vcmask 581160
        %357 = vst.msk [vmem:[#allocation2 + $0x8] sm:$0xff] %vm356, 0.0
        %vm358 = vcmask 728760
        %359 = vst.msk [vmem:[#allocation2 + $0x8] sm:$0xff] %vm358, 0.0
        %vm360 = vcmask 876360
        %361 = vst.msk [vmem:[#allocation2 + $0x8] sm:$0xff] %vm360, 0.0
        %vm362 = vcmask 1023960
        %363 = vst.msk [vmem:[#allocation2 + $0x8] sm:$0xff] %vm362, 0.0
        %vm364 = vcmask 121960
        %365 = vst.msk [vmem:[#allocation2 + $0x10] sm:$0xff] %vm364, 0.0
        %vm366 = vcmask 269560
        %367 = vst.msk [vmem:[#allocation2 + $0x10] sm:$0xff] %vm366, 0.0
        %vm368 = vcmask 703880
        %369 = vst.msk [vmem:[#allocation2 + $0x10] sm:$0xff] %vm368, 0.0
        %371 = vrot.lane.b32.xlu0 %v334, 19
        %v372 = vpop.permute.xlu0 %371
        %vm374 = vcmask 285848
        %375 = vst.msk [vmem:[#allocation2] sm:$0xff] %vm374, %v372
        %376 = vrot.lane.b32.xlu0 %v334, 21
        %v377 = vpop.permute.xlu0 %376
        %vm379 = vcmask 433448
        %380 = vst.msk [vmem:[#allocation2] sm:$0xff] %vm379, %v377
        %381 = vrot.lane.b32.xlu0 %v334, 23
        %v382 = vpop.permute.xlu0 %381
        %vm384 = vcmask 581048
        %385 = vst.msk [vmem:[#allocation2] sm:$0xff] %vm384, %v382
        %386 = vrot.lane.b32.xlu0 %v334, 25
        %v387 = vpop.permute.xlu0 %386
        %vm389 = vcmask 728648
        %390 = vst.msk [vmem:[#allocation2] sm:$0xff] %vm389, %v387
        %391 = vrot.lane.b32.xlu0 %v334, 27
        %v392 = vpop.permute.xlu0 %391
        %vm394 = vcmask 876248
        %395 = vst.msk [vmem:[#allocation2] sm:$0xff] %vm394, %v392
        %396 = vrot.lane.b32.xlu0 %v334, 29
        %v397 = vpop.permute.xlu0 %396
        %vm399 = vcmask 1023848
        %400 = vst.msk [vmem:[#allocation2] sm:$0xff] %vm399, %v397
        %401 = vrot.lane.b32.xlu0 %v334, 31
        %v402 = vpop.permute.xlu0 %401
        %vm404 = vcmask 1048568
        %405 = vst.msk [vmem:[#allocation2] sm:$0xff] %vm404, %v402
        %vm406 = vcmask 121856
        %407 = vst.msk [vmem:[#allocation2 + $0x8] sm:$0xff] %vm406, %v402
        %408 = vrot.lane.b32.xlu0 %v334, 33
        %v409 = vpop.permute.xlu0 %408
        %vm411 = vcmask 269448
        %412 = vst.msk [vmem:[#allocation2 + $0x8] sm:$0xff] %vm411, %v409
        %414 = vrot.lane.b32.xlu0 %v335, 35
        %v415 = vpop.permute.xlu0 %414
        %vm417 = vcmask 417048
        %418 = vst.msk [vmem:[#allocation2 + $0x8] sm:$0xff] %vm417, %v415
        %419 = vrot.lane.b32.xlu0 %v335, 37
        %v420 = vpop.permute.xlu0 %419
        %vm422 = vcmask 564648
        %423 = vst.msk [vmem:[#allocation2 + $0x8] sm:$0xff] %vm422, %v420
        %424 = vrot.lane.b32.xlu0 %v335, 39
        %v425 = vpop.permute.xlu0 %424
        %vm427 = vcmask 712248
        %428 = vst.msk [vmem:[#allocation2 + $0x8] sm:$0xff] %vm427, %v425
        %429 = vrot.lane.b32.xlu0 %v335, 41
        %v430 = vpop.permute.xlu0 %429
        %vm432 = vcmask 859848
        %433 = vst.msk [vmem:[#allocation2 + $0x8] sm:$0xff] %vm432, %v430
        %434 = vrot.lane.b32.xlu0 %v335, 43
        %v435 = vpop.permute.xlu0 %434
        %vm437 = vcmask 1007448
        %438 = vst.msk [vmem:[#allocation2 + $0x8] sm:$0xff] %vm437, %v435
        %439 = vrot.lane.b32.xlu0 %v335, 45
        %v440 = vpop.permute.xlu0 %439
        %vm442 = vcmask 1048552
        %443 = vst.msk [vmem:[#allocation2 + $0x8] sm:$0xff] %vm442, %v440
        %vm444 = vcmask 105472
        %445 = vst.msk [vmem:[#allocation2 + $0x10] sm:$0xff] %vm444, %v440
        %446 = vrot.lane.b32.xlu0 %v335, 47
        %v447 = vpop.permute.xlu0 %446
        %vm449 = vcmask 253048
        %450 = vst.msk [vmem:[#allocation2 + $0x10] sm:$0xff] %vm449, %v447
        %451 = vrot.lane.b32.xlu0 %v335, 49
        %v452 = vpop.permute.xlu0 %451
        %vm454 = vcmask 400648
        %455 = vst.msk [vmem:[#allocation2 + $0x10] sm:$0xff] %vm454, %v452
        %v456 = vld [vmem:[%s2] sm:$0xff]
        %v457 = vld [vmem:[#allocation2] sm:$0xff]
        %v458 = vld [vmem:[#allocation2 + $0x8] sm:$0xff]
        %v459 = vld [vmem:[#allocation2 + $0x10] sm:$0xff]
        %461 = vset.pattern.permute.xlu0 0
        %462 = vperm.xlu0 %461, %v456
        %v463 = vpop.permute.xlu0 %462
        %v465 = vmul.f32 %v457, %v463
        %v466 = vmul.f32 %v458, %v463
        %v467 = vmul.f32 %v459, %v463
        %468 = vset.pattern.permute.xlu0 1
        %469 = vperm.xlu0 %468, %v456
        %v470 = vpop.permute.xlu0 %469
        %v472 = vmul.f32 %v457, %v470
        %v473 = vmul.f32 %v458, %v470
        %v474 = vmul.f32 %v459, %v470
        %478 = vrot.lane.b32.xlu0 %v472, 127
        %v479 = vpop.permute.xlu0 %478
        %480 = vrot.lane.b32.xlu0 %v473, 127
        %v481 = vpop.permute.xlu0 %480
        %482 = vrot.lane.b32.xlu0 %v474, 127
        %v483 = vpop.permute.xlu0 %482
        %vm484 = vcmask 1039360
        %v485 = vsel %vm484, %v479, %v481
        %v486 = vsel %vm484, %v481, %v483
        %v490 = vadd.f32 %v465, %v485
        %v491 = vadd.f32 %v466, %v486
        %v492 = vadd.f32 %v467, %v483
        %493 = vset.pattern.permute.xlu0 2
        %494 = vperm.xlu0 %493, %v456
        %v495 = vpop.permute.xlu0 %494
        %v497 = vmul.f32 %v457, %v495
        %v498 = vmul.f32 %v458, %v495
        %v499 = vmul.f32 %v459, %v495
        %503 = vrot.lane.b32.xlu0 %v497, 126
        %v504 = vpop.permute.xlu0 %503
        %505 = vrot.lane.b32.xlu0 %v498, 126
        %v506 = vpop.permute.xlu0 %505
        %507 = vrot.lane.b32.xlu0 %v499, 126
        %v508 = vpop.permute.xlu0 %507
        %vm509 = vcmask 1031168
        %v510 = vsel %vm509, %v504, %v506
        %v511 = vsel %vm509, %v506, %v508
        %v515 = vadd.f32 %v490, %v510
        %v516 = vadd.f32 %v491, %v511
        %v517 = vadd.f32 %v492, %v508
        %518 = vset.pattern.permute.xlu0 3
        %519 = vperm.xlu0 %518, %v456
        %v520 = vpop.permute.xlu0 %519
        %v522 = vmul.f32 %v457, %v520
        %v523 = vmul.f32 %v458, %v520
        %v524 = vmul.f32 %v459, %v520
        %528 = vrot.lane.b32.xlu0 %v522, 110
        %v529 = vpop.permute.xlu0 %528
        %530 = vrot.lane.b32.xlu0 %v523, 110
        %v531 = vpop.permute.xlu0 %530
        %532 = vrot.lane.b32.xlu0 %v524, 110
        %v533 = vpop.permute.xlu0 %532
        %vm534 = vcmask 900096
        %v535 = vsel %vm534, %v529, %v531
        %v536 = vsel %vm534, %v531, %v533
        %v540 = vadd.f32 %v515, %v535
        %v541 = vadd.f32 %v516, %v536
        %v542 = vadd.f32 %v517, %v533
        %543 = vset.pattern.permute.xlu0 4
        %544 = vperm.xlu0 %543, %v456
        %v545 = vpop.permute.xlu0 %544
        %v547 = vmul.f32 %v457, %v545
        %v548 = vmul.f32 %v458, %v545
        %v549 = vmul.f32 %v459, %v545
        %553 = vrot.lane.b32.xlu0 %v547, 109
        %v554 = vpop.permute.xlu0 %553
        %555 = vrot.lane.b32.xlu0 %v548, 109
        %v556 = vpop.permute.xlu0 %555
        %557 = vrot.lane.b32.xlu0 %v549, 109
        %v558 = vpop.permute.xlu0 %557
        %vm559 = vcmask 891904
        %v560 = vsel %vm559, %v554, %v556
        %v561 = vsel %vm559, %v556, %v558
        %v565 = vadd.f32 %v540, %v560
        %v566 = vadd.f32 %v541, %v561
        %v567 = vadd.f32 %v542, %v558
        %568 = vset.pattern.permute.xlu0 5
        %569 = vperm.xlu0 %568, %v456
        %v570 = vpop.permute.xlu0 %569
        %v572 = vmul.f32 %v457, %v570
        %v573 = vmul.f32 %v458, %v570
        %v574 = vmul.f32 %v459, %v570
        %578 = vrot.lane.b32.xlu0 %v572, 108
        %v579 = vpop.permute.xlu0 %578
        %580 = vrot.lane.b32.xlu0 %v573, 108
        %v581 = vpop.permute.xlu0 %580
        %582 = vrot.lane.b32.xlu0 %v574, 108
        %v583 = vpop.permute.xlu0 %582
        %vm584 = vcmask 883712
        %v585 = vsel %vm584, %v579, %v581
        %v586 = vsel %vm584, %v581, %v583
        %v590 = vadd.f32 %v565, %v585
        %v591 = vadd.f32 %v566, %v586
        %v592 = vadd.f32 %v567, %v583
        %593 = vset.pattern.permute.xlu0 6
        %594 = vperm.xlu0 %593, %v456
        %v595 = vpop.permute.xlu0 %594
        %v597 = vmul.f32 %v457, %v595
        %v598 = vmul.f32 %v458, %v595
        %v599 = vmul.f32 %v459, %v595
        %603 = vrot.lane.b32.xlu0 %v597, 92
        %v604 = vpop.permute.xlu0 %603
        %605 = vrot.lane.b32.xlu0 %v598, 92
        %v606 = vpop.permute.xlu0 %605
        %607 = vrot.lane.b32.xlu0 %v599, 92
        %v608 = vpop.permute.xlu0 %607
        %vm609 = vcmask 752640
        %v610 = vsel %vm609, %v604, %v606
        %v611 = vsel %vm609, %v606, %v608
        %v615 = vadd.f32 %v590, %v610
        %v616 = vadd.f32 %v591, %v611
        %v617 = vadd.f32 %v592, %v608
        %618 = vset.pattern.permute.xlu0 7
        %619 = vperm.xlu0 %618, %v456
        %v620 = vpop.permute.xlu0 %619
        %v622 = vmul.f32 %v457, %v620
        %v623 = vmul.f32 %v458, %v620
        %v624 = vmul.f32 %v459, %v620
        %628 = vrot.lane.b32.xlu0 %v622, 91
        %v629 = vpop.permute.xlu0 %628
        %630 = vrot.lane.b32.xlu0 %v623, 91
        %v631 = vpop.permute.xlu0 %630
        %632 = vrot.lane.b32.xlu0 %v624, 91
        %v633 = vpop.permute.xlu0 %632
        %vm634 = vcmask 744448
        %v635 = vsel %vm634, %v629, %v631
        %v636 = vsel %vm634, %v631, %v633
        %v640 = vadd.f32 %v615, %v635
        %v641 = vadd.f32 %v616, %v636
        %v642 = vadd.f32 %v617, %v633
        %643 = vset.pattern.permute.xlu0 8
        %644 = vperm.xlu0 %643, %v456
        %v645 = vpop.permute.xlu0 %644
        %v647 = vmul.f32 %v457, %v645
        %v648 = vmul.f32 %v458, %v645
        %v649 = vmul.f32 %v459, %v645
        %653 = vrot.lane.b32.xlu0 %v647, 90
        %v654 = vpop.permute.xlu0 %653
        %655 = vrot.lane.b32.xlu0 %v648, 90
        %v656 = vpop.permute.xlu0 %655
        %657 = vrot.lane.b32.xlu0 %v649, 90
        %v658 = vpop.permute.xlu0 %657
        %vm659 = vcmask 736256
        %v660 = vsel %vm659, %v654, %v656
        %v661 = vsel %vm659, %v656, %v658
        %v665 = vadd.f32 %v640, %v660
        %v666 = vadd.f32 %v641, %v661
        %v667 = vadd.f32 %v642, %v658
        %668 = vset.pattern.permute.xlu0 2
        %669 = vperm.xlu0 %668, %v265
        %v670 = vpop.permute.xlu0 %669
        %v672 = vadd.f32 %v665, %v670
        %v673 = vadd.f32 %v666, %v670
        %v674 = vadd.f32 %v667, %v670
        %vm675 = vcmp.ge.f32.partialorder %v672, 0.0
        %vm676 = vcmp.ge.f32.partialorder %v673, 0.0
        %vm677 = vcmp.ge.f32.partialorder %v674, 0.0
        %678 = vset.pattern.permute.xlu0 3
        %679 = vperm.xlu0 %678, %v265
        %v680 = vpop.permute.xlu0 %679
        %v682 = vmul.f32 %v680, %v672
        %v683 = vmul.f32 %v680, %v673
        %v684 = vmul.f32 %v680, %v674
        %v685 = vsel %vm675, %v672, %v682
        %v686 = vsel %vm676, %v673, %v683
        %v687 = vsel %vm677, %v674, %v684
        %vm688 = vcmask 146432
        %689 = vst.msk [vmem:[#allocation3] sm:$0xff] %vm688, %v685
        %691 = vrot.lane.b32.xlu0 %v685, 110
        %v692 = vpop.permute.xlu0 %691
        %vm694 = vcmask 294032
        %695 = vst.msk [vmem:[#allocation3] sm:$0xff] %vm694, %v692
        %696 = vrot.lane.b32.xlu0 %v685, 92
        %v697 = vpop.permute.xlu0 %696
        %vm699 = vcmask 441632
        %700 = vst.msk [vmem:[#allocation3] sm:$0xff] %vm699, %v697
        %701 = vrot.lane.b32.xlu0 %v685, 74
        %v702 = vpop.permute.xlu0 %701
        %vm704 = vcmask 589232
        %705 = vst.msk [vmem:[#allocation3] sm:$0xff] %vm704, %v702
        %707 = vrot.lane.b32.xlu0 %v686, 56
        %v708 = vpop.permute.xlu0 %707
        %vm710 = vcmask 736832
        %711 = vst.msk [vmem:[#allocation3] sm:$0xff] %vm710, %v708
        %712 = vrot.lane.b32.xlu0 %v686, 38
        %v713 = vpop.permute.xlu0 %712
        %vm715 = vcmask 884432
        %716 = vst.msk [vmem:[#allocation3] sm:$0xff] %vm715, %v713
        %717 = vrot.lane.b32.xlu0 %v686, 20
        %v718 = vpop.permute.xlu0 %717
        %vm720 = vcmask 1032032
        %721 = vst.msk [vmem:[#allocation3] sm:$0xff] %vm720, %v718
        %723 = vrot.lane.b32.xlu0 %v686, 2
        %v724 = vpop.permute.xlu0 %723
        %725 = vrot.lane.b32.xlu0 %v687, 2
        %v726 = vpop.permute.xlu0 %725
        %vm727 = vcmask 15360
        %v728 = vsel %vm727, %v724, %v726
        %vm731 = vcmask 1048560
        %732 = vst.msk [vmem:[#allocation3] sm:$0xff] %vm731, %v724
        %vm733 = vcmask 130048
        %734 = vst.msk [vmem:[#allocation3 + $0x8] sm:$0xff] %vm733, %v728
        %vm735 = vcmask 1047680
        %736 = vst.msk [vmem:[#allocation3 + $0x8] sm:$0xff] %vm735, 0.0
        %v737 = vld [vmem:[#allocation4] sm:$0xff]
        %v738 = vld [vmem:[#allocation3] sm:$0xff]
        %v739 = vld [vmem:[#allocation3 + $0x8] sm:$0xff]
        %v740 = vld [vmem:[%s5] sm:$0xff]
        %742 = vset.pattern.permute.xlu0 0
        %743 = vperm.xlu0 %742, %v740
        %v744 = vpop.permute.xlu0 %743
        %vm746 = vcmask 64512
        %v748 = vsel %vm746, %v737, 0
        %750 = vmatpush.msra.mxu0 0.0
        %751 = vmatpush.msra.mxu0 0.0
        %752 = vmatpush.msra.mxu0 0.0
        %753 = vmatpush.msra.mxu0 0.0
        %754 = vmatpush.msra.mxu0 0.0
        %755 = vmatpush.msra.mxu0 0.0
        %756 = vmatpush.msra.mxu0 0.0
        %757 = vmatpush.msra.mxu0 0.0
        %758 = vmatpush.msra.mxu0 0.0
        %759 = vmatpush.msra.mxu0 0.0
        %760 = vmatpush.msra.mxu0 0.0
        %761 = vmatpush.msra.mxu0 0.0
        %762 = vmatpush.msra.mxu0 0.0
        %763 = vmatpush.msra.mxu0 0.0
        %764 = vmatpush.msra.mxu0 0.0
        %765 = vmatpush.msra.mxu0 %v738
        %766 = vmatmul.f32.gmra.mxu0 %v748
        %v767 = vpop.f32.mrf.mxu0
        %v768 = vadd.f32 %v744, %v767
        %769 = vdwg.mxu0
        %770 = vmatpush.msra.mxu0 0.0
        %771 = vmatpush.msra.mxu0 0.0
        %772 = vmatpush.msra.mxu0 0.0
        %773 = vmatpush.msra.mxu0 0.0
        %774 = vmatpush.msra.mxu0 0.0
        %775 = vmatpush.msra.mxu0 0.0
        %776 = vmatpush.msra.mxu0 0.0
        %777 = vmatpush.msra.mxu0 0.0
        %778 = vmatpush.msra.mxu0 0.0
        %779 = vmatpush.msra.mxu0 0.0
        %780 = vmatpush.msra.mxu0 0.0
        %781 = vmatpush.msra.mxu0 0.0
        %782 = vmatpush.msra.mxu0 0.0
        %783 = vmatpush.msra.mxu0 0.0
        %784 = vmatpush.msra.mxu0 0.0
        %785 = vmatpush.msra.mxu0 %v739
        %786 = vmatmul.f32.gmra.mxu0 %v748
        %v787 = vpop.f32.mrf.mxu0
        %v788 = vadd.f32 %v744, %v787
        %789 = vdwg.mxu0
        %790 = vst [vmem:[%s259] sm:$0xff] %v768
        %791 = vst [vmem:[%s259 + $0x8] sm:$0xff] %v788
        %s792 = sand.u32 %s160, 1
        %s793 = scalar_lea.sflag [#allocation6], %s792
        %s794 = sand.u32 %s160, 1
        %s795 = smul.addr %s794, 16
        %s796 = scalar_lea.vmem [#allocation7], %s795
        // Predicated region
        $region49: #{tpu_custom_call.1} parent=43 // pred_check
          %p797 = pneg %p170
        $region50: #{tpu_custom_call.1} parent=43 // pred_check_branch
          %799 = sbr.rel (%p797) target = $region52
        $region51: #{tpu_custom_call.1} parent=43 // pred_region
          %801 = vsyncadd %s793, 0
          %s802 = smul.addr %s21, 2
          %s803 = smul.addr %s802, 8
          %s804 = scalar_lea.hbm %s6, %s803
          %s806 = sshll.u32 %s796, 4
          %s807 = int_to_ptr.vmem [resolvable:$true] %s806
          %s808 = sshll.u32 %s804, 4
          %s809 = int_to_ptr.hbm [resolvable:$true] %s808
          %811 = dma.vmem_to_hbm [thread:$0]  %s807, 256, %s809, %s793
        $region52: #{tpu_custom_call.1} parent=43 // pred_fallthru
          _
      $region44: #{tpu_custom_call.1} parent=5 // pred_fallthru
        _
      %p812 = scmp.le.s32.totalorder 2, %s16
      // Predicated region
      $region53: #{tpu_custom_call.1} parent=5 // pred_check
        %p813 = pneg %p812
      $region54: #{tpu_custom_call.1} parent=5 // pred_check_branch
        %815 = sbr.rel (%p813) target = $region56
      $region55: #{tpu_custom_call.1} parent=5 // pred_region
        %s816 = ssub.s32 %s16, 2
        // Predicated region
        $region57: #{tpu_custom_call.1} parent=55 // pred_check
          %p817 = pneg %p176
        $region58: #{tpu_custom_call.1} parent=55 // pred_check_branch
          %819 = sbr.rel (%p817) target = $region60
        $region59: #{tpu_custom_call.1} parent=55 // pred_region
          %s820 = sand.u32 %s161, 1
          %s821 = scalar_lea.sflag [#allocation6], %s820
          %s822 = sand.u32 %s161, 1
          %s823 = smul.addr %s822, 16
          %s824 = scalar_lea.vmem [#allocation7], %s823
          %826 = dma.done %s821, 256
        $region60: #{tpu_custom_call.1} parent=55 // pred_fallthru
          _
      $region56: #{tpu_custom_call.1} parent=5 // pred_fallthru
        _
    $region6: #{tpu_custom_call.1} parent=1 // loop_footer
      %s20 = sadd.s32 1, %s16
    $region7: #{tpu_custom_call.1} parent=1 // loop_footer_branch
      %15 = sbr.rel target = $region3
    $region8: #{tpu_custom_call.1} parent=1 // loop_exit
      _
    %827 = vsyncpa [#allocation5], 1
    %s828 = scalar_lea.sflag [#allocation5], 1
    %829 = vsyncpa %s828, 1
    %830 = vsyncpa [#allocation6], 1
    %s831 = scalar_lea.sflag [#allocation6], 1
    %832 = vsyncpa %s831, 1

</llo_original>
